<compile_context>
chip_gen: v6e
topology: v6e:2x2x1
jax: 0.10.0
libtpu: 0.0.40
codegen_flags: <defaults>
</compile_context>

<pallas_src>
import jax
import jax.numpy as jnp
from jax.experimental import pallas as pl
from jax.experimental.pallas import tpu as pltpu


def _interp_matrix(out_size: int, in_size: int) -> jnp.ndarray:
    """Row-interpolation matrix for bilinear resize with align_corners=True."""
    if out_size == 1:
        src = jnp.zeros((1,), dtype=jnp.float32)
    else:
        src = jnp.arange(out_size, dtype=jnp.float32) * (
            (in_size - 1) / (out_size - 1))
    lo = jnp.clip(jnp.floor(src).astype(jnp.int32), 0, in_size - 1)
    hi = jnp.clip(lo + 1, 0, in_size - 1)
    w_hi = src - lo.astype(jnp.float32)
    w_lo = 1.0 - w_hi
    rows = jnp.arange(out_size)
    m = jnp.zeros((out_size, in_size), dtype=jnp.float32)
    m = m.at[rows, lo].add(w_lo)
    m = m.at[rows, hi].add(w_hi)
    return m


def _fpn_block_kernel(x_ref, skip_ref, ry_ref, rxt_ref, w_ref, b_ref, out_ref):
    # Block shapes (all static):
    #   x_ref:    (nb, Cp, Hx, Wx)   coarse pyramid feature (full spatial extent)
    #   skip_ref: (nb, Cs, th*Ws)    skip feature, (h,w)-flattened column tile
    #   ry_ref:   (th, Hx)           H-interp rows for this output-row tile
    #   rxt_ref:  (Wx, Ws)           W-interp matrix (transposed)
    #   w_ref:    (Cp, Cs)           1x1 conv weight
    #   b_ref:    (Cp, 1)            1x1 conv bias (f32)
    #   out_ref:  (nb, Cp, th*Ws)
    nb, cp, hx, wx = x_ref.shape
    th = ry_ref.shape[0]
    ws = rxt_ref.shape[1]
    bsz = nb * cp

    x = x_ref[...].reshape(bsz, hx, wx)

    # Separable bilinear upsample on the MXU (f32 accumulation):
    #   t[b,H,w]  = sum_W x[b,H,W] * RxT[W,w]
    #   up[b,h,w] = sum_H Ry[h,H]  * t[b,H,w]
    rxt_b = jnp.broadcast_to(rxt_ref[...][None], (bsz, wx, ws))
    t = jnp.einsum('bHW,bWs->bHs', x, rxt_b,
                   preferred_element_type=jnp.float32).astype(x.dtype)
    ry_b = jnp.broadcast_to(ry_ref[...][None], (bsz, th, hx))
    up = jnp.einsum('bhH,bHw->bhw', ry_b, t,
                    preferred_element_type=jnp.float32)
    up = up.reshape(nb, cp, th * ws)          # lane-dense (h,w)-flattened slab

    # 1x1 conv + bias epilogue, per-sample stores (no concat, no full temp).
    w = w_ref[...]
    b = b_ref[...]                            # (Cp, 1) f32, broadcasts over lanes
    for n in range(nb):                       # static unroll; nb is small
        conv_n = jnp.dot(w, skip_ref[n], preferred_element_type=jnp.float32)
        out_ref[n] = (up[n] + conv_n + b).astype(out_ref.dtype)


def _pick_h_tile(hs, ws, n_batch_steps, target_lanes=512, min_grid_steps=4):
    """Output-height rows per tile, honoring the TPU (8,128) block constraints."""
    legal = sorted({hs} | {d for d in range(8, hs, 8)
                           if hs % d == 0 and (d * ws) % 128 == 0})
    th = legal[0]
    for d in legal:                       # largest legal tile <= target lane width
        if d * ws <= target_lanes:
            th = d
    # Split further (staying legal & lane-dense) so the grid can pipeline.
    while n_batch_steps * (hs // th) < min_grid_steps:
        smaller = [d for d in legal if d < th]
        if not smaller:
            break
        th = smaller[-1]
    return th


def _padded_block_bytes(shape, dtype):
    lead = 1
    for d in shape[:-2]:
        lead *= d
    sub = -(-shape[-2] // 8) * 8
    lane = -(-shape[-1] // 128) * 128
    return lead * sub * lane * jnp.dtype(dtype).itemsize


def fpn_block(x, skip, conv_w, conv_b, *, batch_block=1, target_lanes=512,
              min_grid_steps=4):
    """x: (N, Cp, Hx, Wx), skip: (N, Cs, Hs, Ws), conv_w: (Cp, Cs), conv_b: (Cp,)."""
    N, Cp, Hx, Wx = x.shape
    Ns, Cs, Hs, Ws = skip.shape
    assert Ns == N
    nb = batch_block if (batch_block and N % batch_block == 0) else 1
    n_b = N // nb

    th = _pick_h_tile(Hs, Ws, n_b, target_lanes, min_grid_steps)
    n_h = Hs // th
    tcol = th * Ws
    hw_out = Hs * Ws

    dtype = x.dtype                                       # no forced f32 upcast
    ry = _interp_matrix(Hs, Hx).astype(dtype)             # (Hs, Hx)
    rxt = _interp_matrix(Ws, Wx).T.astype(dtype)          # (Wx, Ws)
    w = conv_w.astype(dtype)                              # (Cp, Cs)
    b = conv_b.astype(jnp.float32).reshape(Cp, 1)         # (Cp, 1)

    skip_f = skip.reshape(N, Cs, hw_out).astype(dtype)    # pure reshape (lane-dense)

    blocks = [((nb, Cp, Hx, Wx), dtype), ((nb, Cs, tcol), dtype),
              ((th, Hx), dtype), ((Wx, Ws), dtype), ((Cp, Cs), dtype),
              ((Cp, 1), jnp.float32), ((nb, Cp, tcol), dtype)]
    need = 2 * sum(_padded_block_bytes(s, d) for s, d in blocks)  # double-buffered
    vmem_limit = int(min(max(need * 3 // 2, 32 * 2 ** 20), 96 * 2 ** 20))

    out = pl.pallas_call(
        _fpn_block_kernel,
        out_shape=jax.ShapeDtypeStruct((N, Cp, hw_out), dtype),
        grid_spec=pltpu.PrefetchScalarGridSpec(
            num_scalar_prefetch=0,
            grid=(n_b, n_h),
            in_specs=[
                pl.BlockSpec((nb, Cp, Hx, Wx), lambda i, j: (i, 0, 0, 0)),
                pl.BlockSpec((nb, Cs, tcol), lambda i, j: (i, 0, j)),
                pl.BlockSpec((th, Hx), lambda i, j: (j, 0)),
                pl.BlockSpec((Wx, Ws), lambda i, j: (0, 0)),
                pl.BlockSpec((Cp, Cs), lambda i, j: (0, 0)),
                pl.BlockSpec((Cp, 1), lambda i, j: (0, 0)),
            ],
            out_specs=pl.BlockSpec((nb, Cp, tcol), lambda i, j: (i, 0, j)),
        ),
        compiler_params=pltpu.CompilerParams(
            dimension_semantics=("parallel", "parallel"),
            vmem_limit_bytes=vmem_limit),
    )(x, skip_f, ry, rxt, w, b)

    return out.reshape(N, Cp, Hs, Ws)


def _reference(x, skip, conv_w, conv_b):
    """Pure-JAX reference for correctness checking."""
    _, _, Hx, Wx = x.shape
    _, _, Hs, Ws = skip.shape
    ry = _interp_matrix(Hs, Hx)
    rx = _interp_matrix(Ws, Wx)
    up = jnp.einsum('hH,ncHW,wW->nchw', ry, x, rx)
    conv = jnp.einsum('pc,nchw->nphw', conv_w, skip) + conv_b[None, :, None, None]
    return up + conv


if __name__ == "__main__":
    key = jax.random.PRNGKey(0)
    k1, k2, k3, k4 = jax.random.split(key, 4)

    N = 2
    pyramid_channels = 4
    skip_channels = 8
    Hx, Wx = 8, 8        # coarse pyramid feature
    Hs, Ws = 16, 16      # skip feature (target spatial size)

    x = jax.random.normal(k1, (N, pyramid_channels, Hx, Wx), dtype=jnp.float32)
    skip = jax.random.normal(k2, (N, skip_channels, Hs, Ws), dtype=jnp.float32)

    # Deterministic 1x1 conv params (shapes from nn.Conv2d(skip_ch, pyr_ch, 1)).
    fan_in = skip_channels  # kernel_size = 1
    bound = 1.0 / (fan_in ** 0.5)
    conv_w = jax.random.uniform(
        k3, (pyramid_channels, skip_channels), minval=-bound, maxval=bound,
        dtype=jnp.float32)
    conv_b = jax.random.uniform(
        k4, (pyramid_channels,), minval=-bound, maxval=bound, dtype=jnp.float32)

    out = fpn_block(x, skip, conv_w, conv_b)
    out = jax.block_until_ready(out)

    ref = _reference(x, skip, conv_w, conv_b)
    assert out.shape == (N, pyramid_channels, Hs, Ws)
    assert jnp.allclose(out, ref, atol=1e-4, rtol=1e-4)

    print("KERNEL_OK")
</pallas_src>

<mosaic_0001>
module attributes {stable_mosaic.version = 11 : i64} {
  func.func @_fpn_block_kernel(%arg0: i32, %arg1: i32, %arg2: memref<1x4x8x8xf32, #tpu.memory_space<vmem>>, %arg3: memref<1x8x128xf32, #tpu.memory_space<vmem>>, %arg4: memref<8x8xf32, #tpu.memory_space<vmem>>, %arg5: memref<8x16xf32, #tpu.memory_space<vmem>>, %arg6: memref<4x8xf32, #tpu.memory_space<vmem>>, %arg7: memref<4x1xf32, #tpu.memory_space<vmem>>, %arg8: memref<1x4x128xf32, #tpu.memory_space<vmem>>) attributes {dimension_semantics = [#tpu.dimension_semantics<parallel>, #tpu.dimension_semantics<parallel>], iteration_bounds = array<i64: 2, 2>, scalar_prefetch = 0 : i64, scratch_operands = 0 : i64, tpu.core_type = #tpu.core_type<tc>, window_params = [{transform_indices = @transform_0, window_bounds = array<i64: 1, 4, 8, 8>}, {transform_indices = @transform_1, window_bounds = array<i64: 1, 8, 128>}, {transform_indices = @transform_2, window_bounds = array<i64: 8, 8>}, {pipeline_mode = #tpu.pipeline_mode<synchronous>, transform_indices = @transform_3, window_bounds = array<i64: 8, 16>}, {pipeline_mode = #tpu.pipeline_mode<synchronous>, transform_indices = @transform_4, window_bounds = array<i64: 4, 8>}, {pipeline_mode = #tpu.pipeline_mode<synchronous>, transform_indices = @transform_5, window_bounds = array<i64: 4, 1>}, {transform_indices = @transform_6, window_bounds = array<i64: 1, 4, 128>}]} {
    %c0 = arith.constant 0 : index
    %c0_0 = arith.constant 0 : index
    %c0_1 = arith.constant 0 : index
    %c0_2 = arith.constant 0 : index
    %0 = vector.load %arg2[%c0, %c0_0, %c0_1, %c0_2] : memref<1x4x8x8xf32, #tpu.memory_space<vmem>>, vector<1x4x8x8xf32>
    %1 = vector.shape_cast %0 : vector<1x4x8x8xf32> to vector<4x8x8xf32>
    %c0_3 = arith.constant 0 : index
    %c0_4 = arith.constant 0 : index
    %2 = vector.load %arg5[%c0_3, %c0_4] : memref<8x16xf32, #tpu.memory_space<vmem>>, vector<8x16xf32>
    %3 = vector.shape_cast %2 : vector<8x16xf32> to vector<1x8x16xf32>
    %4 = vector.shape_cast %3 : vector<1x8x16xf32> to vector<1x8x16xf32>
    %5 = vector.broadcast %4 : vector<1x8x16xf32> to vector<4x8x16xf32>
    "tpu.trace_start"() <{level = 10 : i32, message = "bHW,bWs->bHs"}> : () -> ()
    %cst = arith.constant dense<0.000000e+00> : vector<4x8x16xf32>
    %6 = tpu.matmul %1, %5, %cst {dimension_numbers = #tpu.dot_dimension_numbers<[2], [1], [1], [2], [0, 0, 0, 1, 1, 2], [0], [0]>} : vector<4x8x8xf32>, vector<4x8x16xf32>, vector<4x8x16xf32> -> vector<4x8x16xf32>
    "tpu.trace_stop"() : () -> ()
    %c0_5 = arith.constant 0 : index
    %c0_6 = arith.constant 0 : index
    %7 = vector.load %arg4[%c0_5, %c0_6] : memref<8x8xf32, #tpu.memory_space<vmem>>, vector<8x8xf32>
    %8 = vector.shape_cast %7 : vector<8x8xf32> to vector<1x8x8xf32>
    %9 = vector.shape_cast %8 : vector<1x8x8xf32> to vector<1x8x8xf32>
    %10 = vector.broadcast %9 : vector<1x8x8xf32> to vector<4x8x8xf32>
    "tpu.trace_start"() <{level = 10 : i32, message = "bhH,bHw->bhw"}> : () -> ()
    %cst_7 = arith.constant dense<0.000000e+00> : vector<4x8x16xf32>
    %11 = tpu.matmul %10, %6, %cst_7 {dimension_numbers = #tpu.dot_dimension_numbers<[2], [1], [1], [2], [0, 0, 0, 1, 1, 2], [0], [0]>} : vector<4x8x8xf32>, vector<4x8x16xf32>, vector<4x8x16xf32> -> vector<4x8x16xf32>
    "tpu.trace_stop"() : () -> ()
    %12 = vector.shape_cast %11 : vector<4x8x16xf32> to vector<1x4x128xf32>
    %c0_8 = arith.constant 0 : index
    %c0_9 = arith.constant 0 : index
    %13 = vector.load %arg6[%c0_8, %c0_9] : memref<4x8xf32, #tpu.memory_space<vmem>>, vector<4x8xf32>
    %c0_10 = arith.constant 0 : index
    %c0_11 = arith.constant 0 : index
    %14 = vector.load %arg7[%c0_10, %c0_11] : memref<4x1xf32, #tpu.memory_space<vmem>>, vector<4x1xf32>
    %c0_12 = arith.constant 0 : index
    %c0_13 = arith.constant 0 : index
    %c0_14 = arith.constant 0 : index
    %15 = vector.load %arg3[%c0_12, %c0_13, %c0_14] : memref<1x8x128xf32, #tpu.memory_space<vmem>>, vector<1x8x128xf32>
    %16 = vector.shape_cast %15 : vector<1x8x128xf32> to vector<8x128xf32>
    %cst_15 = arith.constant dense<0.000000e+00> : vector<4x128xf32>
    %17 = tpu.matmul %13, %16, %cst_15 {dimension_numbers = #tpu.dot_dimension_numbers<[1], [0], [0], [1], [0, 0, 1, 1], [], []>} : vector<4x8xf32>, vector<8x128xf32>, vector<4x128xf32> -> vector<4x128xf32>
    %18 = vector.shape_cast %12 : vector<1x4x128xf32> to vector<4x128xf32>
    %19 = arith.addf %18, %17 : vector<4x128xf32>
    %20 = vector.broadcast %14 : vector<4x1xf32> to vector<4x128xf32>
    %21 = arith.addf %19, %20 : vector<4x128xf32>
    %c0_16 = arith.constant 0 : index
    %c0_17 = arith.constant 0 : index
    %c0_18 = arith.constant 0 : index
    %22 = vector.load %arg8[%c0_16, %c0_17, %c0_18] : memref<1x4x128xf32, #tpu.memory_space<vmem>>, vector<1x4x128xf32>
    %23 = vector.shape_cast %22 : vector<1x4x128xf32> to vector<4x128xf32>
    %24 = vector.shape_cast %21 : vector<4x128xf32> to vector<1x4x128xf32>
    tpu.vector_store %arg8[%c0_16, %c0_17, %c0_18], %24 {strides = array<i32>} : memref<1x4x128xf32, #tpu.memory_space<vmem>>, vector<1x4x128xf32>,
    return
  }
  func.func @transform_0(%arg0: i32, %arg1: i32) -> (i32, i32, i32, i32) {
    %c0_i32 = arith.constant 0 : i32
    %c0_i32_0 = arith.constant 0 : i32
    %c0_i32_1 = arith.constant 0 : i32
    %c0_i32_2 = arith.constant 0 : i32
    return %arg0, %c0_i32, %c0_i32_0, %c0_i32_1 : i32, i32, i32, i32
  }
  func.func @transform_1(%arg0: i32, %arg1: i32) -> (i32, i32, i32) {
    %c0_i32 = arith.constant 0 : i32
    %c0_i32_0 = arith.constant 0 : i32
    return %arg0, %c0_i32, %arg1 : i32, i32, i32
  }
  func.func @transform_2(%arg0: i32, %arg1: i32) -> (i32, i32) {
    %c0_i32 = arith.constant 0 : i32
    %c0_i32_0 = arith.constant 0 : i32
    return %arg1, %c0_i32 : i32, i32
  }
  func.func @transform_3(%arg0: i32, %arg1: i32) -> (i32, i32) {
    %c0_i32 = arith.constant 0 : i32
    %c0_i32_0 = arith.constant 0 : i32
    %c0_i32_1 = arith.constant 0 : i32
    return %c0_i32, %c0_i32_0 : i32, i32
  }
  func.func @transform_4(%arg0: i32, %arg1: i32) -> (i32, i32) {
    %c0_i32 = arith.constant 0 : i32
    %c0_i32_0 = arith.constant 0 : i32
    %c0_i32_1 = arith.constant 0 : i32
    return %c0_i32, %c0_i32_0 : i32, i32
  }
  func.func @transform_5(%arg0: i32, %arg1: i32) -> (i32, i32) {
    %c0_i32 = arith.constant 0 : i32
    %c0_i32_0 = arith.constant 0 : i32
    %c0_i32_1 = arith.constant 0 : i32
    return %c0_i32, %c0_i32_0 : i32, i32
  }
  func.func @transform_6(%arg0: i32, %arg1: i32) -> (i32, i32, i32) {
    %c0_i32 = arith.constant 0 : i32
    %c0_i32_0 = arith.constant 0 : i32
    return %arg0, %c0_i32, %arg1 : i32, i32, i32
  }
}

</mosaic_0001>

<llo_original>
// kernel: tpu_custom_call.1
$region0: #{tpu_custom_call.1}
  #allocation0 [shape = 'u32[]', space=smem, size = 0x4, offset = 0x4, fixed_abs, tag = 'smem constant byte address 0x4 - core index']
  #allocation1 [shape = 'u32[144,128]{1,0:T(1,128)}', space=vmem, size = 0x12000, scoped, tag = 'internal scratch']
  %s0 = inlined_call_operand.hbm [shape: f32[2,4,8,8], index: 0, kind: input, shape index: {}]
  %s1 = inlined_call_operand.hbm [shape: f32[2,8,256], index: 1, kind: input, shape index: {}]
  %s2 = inlined_call_operand.vmem [shape: f32[16,8], index: 2, kind: input, shape index: {}]
  %s3 = inlined_call_operand.vmem [shape: f32[8,16], index: 3, kind: input, shape index: {}]
  %s4 = inlined_call_operand.vmem [shape: f32[4,8], index: 4, kind: input, shape index: {}]
  %s5 = inlined_call_operand.vmem [shape: f32[4,1], index: 5, kind: input, shape index: {}]
  %s6 = inlined_call_operand.hbm [shape: f32[2,4,256], index: 6, kind: output, shape index: {}]
  %s7 = sld [smem:[#allocation0]]
  $region65: #{tpu_custom_call.1} parent=0
    _
  %s9 = ssub.s32 1, %s7
  %s10 = scalar_select 0, %s9, %s7
  $region1: #{tpu_custom_call.1} parent=0
    #allocation2 [shape = 'u8[32768]{0}', space=vmem, size = 0x8000, scoped, tag = 'input window, operand 0']
    #allocation3 [shape = 's32[2]{0}', space=sflag, size = 0x8, scoped, tag = 'scoped memory for tpu_custom_call.1']
    #allocation4 [shape = 's32[2]{0}', space=sflag, size = 0x8, scoped, tag = 'scoped memory for tpu_custom_call.1']
    #allocation5 [shape = 'u8[8192]{0}', space=vmem, size = 0x2000, scoped, tag = 'input window, operand 1']
    #allocation6 [shape = 's32[2]{0}', space=sflag, size = 0x8, scoped, tag = 'scoped memory for tpu_custom_call.1']
    #allocation7 [shape = 'u8[4096]{0}', space=vmem, size = 0x1000, scoped, tag = 'output window, operand 0']
    %11 = vsyncpa [#allocation3], 0
    %s12 = scalar_lea.sflag [#allocation3], 1
    %13 = vsyncpa %s12, 0
    %14 = vsyncpa [#allocation6], 0
    %s15 = scalar_lea.sflag [#allocation6], 1
    %16 = vsyncpa %s15, 0
    %17 = vsyncpa [#allocation4], 0
    %s18 = scalar_lea.sflag [#allocation4], 1
    %19 = vsyncpa %s18, 0
    loop: start=0, step=1, limit=6
    $region2: #{tpu_custom_call.1} parent=1 // loop_pre_header
      _
    $region3: #{tpu_custom_call.1} parent=1 // loop_header
      %s21 = sphi 0, %s25
      %p22 = scmp.ge.s32.totalorder %s21, 6
      %s28 = sphi 0, %s40
      %s29 = sphi 0, %s36
      %s30 = sphi 0, %s28
      %s31 = sphi 0, %s29
      %s32 = sphi 0, %s30
      %s33 = sphi 0, %s31
      %s43 = sphi 0, %s45
      %s46 = sphi 0, %s43
      %s47 = sphi 0, %s46
      %s63 = sphi 0, %s47
      %s71 = sphi 0, %s73
      %s74 = sphi 0, %s71
      %s75 = sphi 0, %s74
      %s91 = sphi 0, %s75
      %s97 = sphi 0, %s99
      %s100 = sphi 0, %s97
      %s101 = sphi 0, %s100
      %s117 = sphi 0, %s101
      %s121 = sphi 0, %s121
      %s123 = sphi 0, %s121
      %s124 = sphi 0, %s123
      %s138 = sphi 0, %s124
      %s142 = sphi 0, %s142
      %s144 = sphi 0, %s142
      %s145 = sphi 0, %s144
      %s159 = sphi 0, %s145
      %s163 = sphi 0, %s163
      %s165 = sphi 0, %s163
      %s166 = sphi 0, %s165
      %s180 = sphi 0, %s166
      %s188 = sphi 0, %s190
      %s191 = sphi 0, %s188
      %s192 = sphi 0, %s191
      %s208 = sphi 0, %s192
    $region4: #{tpu_custom_call.1} parent=1 // loop_header_branch
      %24 = sbr.rel (%p22) target = $region8
    $region5: #{tpu_custom_call.1} parent=1 // loop_body
      %s26 = ssub.s32 %s21, 1
      %s27 = ssub.s32 %s21, 2
      %s34 = sadd.s32 1, %s29
      %p35 = scmp.ge.s32.totalorder %s34, 2
      %s36 = scalar_select %p35, 0, %s34
      %s37 = sadd.s32 1, %s28
      %s38 = scalar_select %p35, %s37, %s28
      %p39 = scmp.ge.s32.totalorder %s38, 2
      %s40 = scalar_select %p39, 0, %s38
      %s41 = ssub.s32 %s28, %s40
      %p42 = scmp.eq.s32.totalorder %s41, 0
      %s44 = sadd.s32 %s43, 1
      %s45 = scalar_select %p42, %s43, %s44
      %p48 = pneg %p42
      %p49 = scmp.eq.s32.totalorder %s21, 3
      %p50 = por %p48, %p49
      %p51 = scmp.ne.s32.totalorder %s43, %s46
      %p52 = scmp.eq.s32.totalorder %s21, 0
      %p53 = por %p51, %p52
      %p54 = scmp.ne.s32.totalorder %s43, %s46
      %p55 = scmp.eq.s32.totalorder %s26, 3
      %p56 = por %p54, %p55
      %p57 = scmp.ne.s32.totalorder %s46, %s47
      %p58 = scmp.eq.s32.totalorder %s26, 0
      %p59 = por %p57, %p58
      %p60 = scmp.ne.s32.totalorder %s46, %s47
      %p61 = scmp.eq.s32.totalorder %s27, 3
      %p62 = por %p60, %p61
      %p64 = scmp.ne.s32.totalorder %s47, %s63
      %p65 = scmp.eq.s32.totalorder %s27, 0
      %p66 = por %p64, %p65
      %s67 = ssub.s32 %s28, %s40
      %s68 = ssub.s32 %s29, %s36
      %s69 = sor.u32 %s67, %s68
      %p70 = scmp.eq.s32.totalorder %s69, 0
      %s72 = sadd.s32 %s71, 1
      %s73 = scalar_select %p70, %s71, %s72
      %p76 = pneg %p70
      %p77 = scmp.eq.s32.totalorder %s21, 3
      %p78 = por %p76, %p77
      %p79 = scmp.ne.s32.totalorder %s71, %s74
      %p80 = scmp.eq.s32.totalorder %s21, 0
      %p81 = por %p79, %p80
      %p82 = scmp.ne.s32.totalorder %s71, %s74
      %p83 = scmp.eq.s32.totalorder %s26, 3
      %p84 = por %p82, %p83
      %p85 = scmp.ne.s32.totalorder %s74, %s75
      %p86 = scmp.eq.s32.totalorder %s26, 0
      %p87 = por %p85, %p86
      %p88 = scmp.ne.s32.totalorder %s74, %s75
      %p89 = scmp.eq.s32.totalorder %s27, 3
      %p90 = por %p88, %p89
      %p92 = scmp.ne.s32.totalorder %s75, %s91
      %p93 = scmp.eq.s32.totalorder %s27, 0
      %p94 = por %p92, %p93
      %s95 = ssub.s32 %s29, %s36
      %p96 = scmp.eq.s32.totalorder %s95, 0
      %s98 = sadd.s32 %s97, 1
      %s99 = scalar_select %p96, %s97, %s98
      %p102 = pneg %p96
      %p103 = scmp.eq.s32.totalorder %s21, 3
      %p104 = por %p102, %p103
      %p105 = scmp.ne.s32.totalorder %s97, %s100
      %p106 = scmp.eq.s32.totalorder %s21, 0
      %p107 = por %p105, %p106
      %p108 = scmp.ne.s32.totalorder %s97, %s100
      %p109 = scmp.eq.s32.totalorder %s26, 3
      %p110 = por %p108, %p109
      %p111 = scmp.ne.s32.totalorder %s100, %s101
      %p112 = scmp.eq.s32.totalorder %s26, 0
      %p113 = por %p111, %p112
      %p114 = scmp.ne.s32.totalorder %s100, %s101
      %p115 = scmp.eq.s32.totalorder %s27, 3
      %p116 = por %p114, %p115
      %p118 = scmp.ne.s32.totalorder %s101, %s117
      %p119 = scmp.eq.s32.totalorder %s27, 0
      %p120 = por %p118, %p119
      %s122 = sadd.s32 %s121, 1
      %p125 = scmp.eq.s32.totalorder %s21, 3
      %p126 = scmp.ne.s32.totalorder %s121, %s123
      %p127 = scmp.eq.s32.totalorder %s21, 0
      %p128 = por %p126, %p127
      %p129 = scmp.ne.s32.totalorder %s121, %s123
      %p130 = scmp.eq.s32.totalorder %s26, 3
      %p131 = por %p129, %p130
      %p132 = scmp.ne.s32.totalorder %s123, %s124
      %p133 = scmp.eq.s32.totalorder %s26, 0
      %p134 = por %p132, %p133
      %p135 = scmp.ne.s32.totalorder %s123, %s124
      %p136 = scmp.eq.s32.totalorder %s27, 3
      %p137 = por %p135, %p136
      %p139 = scmp.ne.s32.totalorder %s124, %s138
      %p140 = scmp.eq.s32.totalorder %s27, 0
      %p141 = por %p139, %p140
      %s143 = sadd.s32 %s142, 1
      %p146 = scmp.eq.s32.totalorder %s21, 3
      %p147 = scmp.ne.s32.totalorder %s142, %s144
      %p148 = scmp.eq.s32.totalorder %s21, 0
      %p149 = por %p147, %p148
      %p150 = scmp.ne.s32.totalorder %s142, %s144
      %p151 = scmp.eq.s32.totalorder %s26, 3
      %p152 = por %p150, %p151
      %p153 = scmp.ne.s32.totalorder %s144, %s145
      %p154 = scmp.eq.s32.totalorder %s26, 0
      %p155 = por %p153, %p154
      %p156 = scmp.ne.s32.totalorder %s144, %s145
      %p157 = scmp.eq.s32.totalorder %s27, 3
      %p158 = por %p156, %p157
      %p160 = scmp.ne.s32.totalorder %s145, %s159
      %p161 = scmp.eq.s32.totalorder %s27, 0
      %p162 = por %p160, %p161
      %s164 = sadd.s32 %s163, 1
      %p167 = scmp.eq.s32.totalorder %s21, 3
      %p168 = scmp.ne.s32.totalorder %s163, %s165
      %p169 = scmp.eq.s32.totalorder %s21, 0
      %p170 = por %p168, %p169
      %p171 = scmp.ne.s32.totalorder %s163, %s165
      %p172 = scmp.eq.s32.totalorder %s26, 3
      %p173 = por %p171, %p172
      %p174 = scmp.ne.s32.totalorder %s165, %s166
      %p175 = scmp.eq.s32.totalorder %s26, 0
      %p176 = por %p174, %p175
      %p177 = scmp.ne.s32.totalorder %s165, %s166
      %p178 = scmp.eq.s32.totalorder %s27, 3
      %p179 = por %p177, %p178
      %p181 = scmp.ne.s32.totalorder %s166, %s180
      %p182 = scmp.eq.s32.totalorder %s27, 0
      %p183 = por %p181, %p182
      %s184 = ssub.s32 %s28, %s40
      %s185 = ssub.s32 %s29, %s36
      %s186 = sor.u32 %s184, %s185
      %p187 = scmp.eq.s32.totalorder %s186, 0
      %s189 = sadd.s32 %s188, 1
      %s190 = scalar_select %p187, %s188, %s189
      %p193 = pneg %p187
      %p194 = scmp.eq.s32.totalorder %s21, 3
      %p195 = por %p193, %p194
      %p196 = scmp.ne.s32.totalorder %s188, %s191
      %p197 = scmp.eq.s32.totalorder %s21, 0
      %p198 = por %p196, %p197
      %p199 = scmp.ne.s32.totalorder %s188, %s191
      %p200 = scmp.eq.s32.totalorder %s26, 3
      %p201 = por %p199, %p200
      %p202 = scmp.ne.s32.totalorder %s191, %s192
      %p203 = scmp.eq.s32.totalorder %s26, 0
      %p204 = por %p202, %p203
      %p205 = scmp.ne.s32.totalorder %s191, %s192
      %p206 = scmp.eq.s32.totalorder %s27, 3
      %p207 = por %p205, %p206
      %p209 = scmp.ne.s32.totalorder %s192, %s208
      %p210 = scmp.eq.s32.totalorder %s27, 0
      %p211 = por %p209, %p210
      %p212 = scmp.le.s32.totalorder 1, %s21
      %p213 = scmp.lt.s32.totalorder %s21, 5
      %p214 = pnand %p212, %p213
      %p215 = pneg %p214
      // Predicated region
      $region9: #{tpu_custom_call.1} parent=5 // pred_check
        _
      $region10: #{tpu_custom_call.1} parent=5 // pred_check_branch
        %217 = sbr.rel (%p214) target = $region12
      $region11: #{tpu_custom_call.1} parent=5 // pred_region
        %s218 = ssub.s32 %s21, 1
        // Predicated region
        $region13: #{tpu_custom_call.1} parent=11 // pred_check
          %p219 = pneg %p134
        $region14: #{tpu_custom_call.1} parent=11 // pred_check_branch
          %221 = sbr.rel (%p219) target = $region16
        $region15: #{tpu_custom_call.1} parent=11 // pred_region
          _
        $region16: #{tpu_custom_call.1} parent=11 // pred_fallthru
          _
        // Predicated region
        $region17: #{tpu_custom_call.1} parent=11 // pred_check
          %p222 = pneg %p155
        $region18: #{tpu_custom_call.1} parent=11 // pred_check_branch
          %224 = sbr.rel (%p222) target = $region20
        $region19: #{tpu_custom_call.1} parent=11 // pred_region
          _
        $region20: #{tpu_custom_call.1} parent=11 // pred_fallthru
          _
        // Predicated region
        $region21: #{tpu_custom_call.1} parent=11 // pred_check
          %p225 = pneg %p176
        $region22: #{tpu_custom_call.1} parent=11 // pred_check_branch
          %227 = sbr.rel (%p225) target = $region24
        $region23: #{tpu_custom_call.1} parent=11 // pred_region
          _
        $region24: #{tpu_custom_call.1} parent=11 // pred_fallthru
          _
      $region12: #{tpu_custom_call.1} parent=5 // pred_fallthru
        _
      %p228 = scmp.lt.s32.totalorder %s21, 4
      // Predicated region
      $region25: #{tpu_custom_call.1} parent=5 // pred_check
        %p229 = pneg %p228
      $region26: #{tpu_custom_call.1} parent=5 // pred_check_branch
        %231 = sbr.rel (%p229) target = $region28
      $region27: #{tpu_custom_call.1} parent=5 // pred_region
        // Predicated region
        $region29: #{tpu_custom_call.1} parent=27 // pred_check
          %p232 = pneg %p53
        $region30: #{tpu_custom_call.1} parent=27 // pred_check_branch
          %234 = sbr.rel (%p232) target = $region32
        $region31: #{tpu_custom_call.1} parent=27 // pred_region
          %s235 = sand.u32 %s43, 1
          %s236 = scalar_lea.sflag [#allocation3], %s235
          %s237 = sand.u32 %s43, 1
          %s238 = smul.addr %s237, 32
          %s239 = scalar_lea.vmem [#allocation2], %s238
          %s241 = ssub.s32 512, 512
          %242 = vsyncadd %s236, %s241
          %s243 = smul.addr %s28, 4
          %s244 = smul.addr %s243, 128
          %s245 = scalar_lea.hbm %s0, %s244
          %s246 = sshll.u32 %s239, 4
          %s247 = int_to_ptr.vmem [resolvable:$true] %s246
          %252 = dma.hbm_to_vmem [thread:$0]  %s245, 512, %s247, %s236, 128, 128, 8
        $region32: #{tpu_custom_call.1} parent=27 // pred_fallthru
          _
        // Predicated region
        $region33: #{tpu_custom_call.1} parent=27 // pred_check
          %p253 = pneg %p81
        $region34: #{tpu_custom_call.1} parent=27 // pred_check_branch
          %255 = sbr.rel (%p253) target = $region36
        $region35: #{tpu_custom_call.1} parent=27 // pred_region
          %s256 = sand.u32 %s71, 1
          %s257 = scalar_lea.sflag [#allocation6], %s256
          %s258 = sand.u32 %s71, 1
          %s259 = smul.addr %s258, 8
          %s260 = scalar_lea.vmem [#allocation5], %s259
          %s262 = ssub.s32 128, 128
          %263 = vsyncadd %s257, %s262
          %s264 = smul.addr %s28, 2
          %s265 = sadd.s32 %s29, %s264
          %s266 = smul.addr %s265, 128
          %s267 = scalar_lea.hbm %s1, %s266
          %s269 = sshll.u32 %s260, 4
          %s270 = int_to_ptr.vmem [resolvable:$true] %s269
          %272 = dma.hbm_to_vmem [thread:$0]  %s267, 128, %s270, %s257
        $region36: #{tpu_custom_call.1} parent=27 // pred_fallthru
          _
        // Predicated region
        $region37: #{tpu_custom_call.1} parent=27 // pred_check
          %p273 = pneg %p107
        $region38: #{tpu_custom_call.1} parent=27 // pred_check_branch
          %275 = sbr.rel (%p273) target = $region40
        $region39: #{tpu_custom_call.1} parent=27 // pred_region
          %p276 = scmp.lt.s32.totalorder %s29, 1
          %s277 = scalar_select %p276, %s29, 1
          %s278 = smul.addr %s277, 8
          %s279 = scalar_lea.vmem %s2, %s278
        $region40: #{tpu_custom_call.1} parent=27 // pred_fallthru
          _
      $region28: #{tpu_custom_call.1} parent=5 // pred_fallthru
        _
      %p280 = scmp.le.s32.totalorder 1, %s21
      %p281 = scmp.lt.s32.totalorder %s21, 5
      %p282 = pnand %p280, %p281
      %p283 = pneg %p282
      // Predicated region
      $region41: #{tpu_custom_call.1} parent=5 // pred_check
        _
      $region42: #{tpu_custom_call.1} parent=5 // pred_check_branch
        %285 = sbr.rel (%p282) target = $region44
      $region43: #{tpu_custom_call.1} parent=5 // pred_region
        %s286 = ssub.s32 %s21, 1
        %s287 = sand.u32 %s46, 1
        %s288 = scalar_lea.sflag [#allocation3], %s287
        %s289 = sand.u32 %s46, 1
        %s290 = smul.addr %s289, 32
        %s291 = scalar_lea.vmem [#allocation2], %s290
        // Predicated region
        $region45: #{tpu_custom_call.1} parent=43 // pred_check
          %p292 = pneg %p59
        $region46: #{tpu_custom_call.1} parent=43 // pred_check_branch
          %294 = sbr.rel (%p292) target = $region48
        $region47: #{tpu_custom_call.1} parent=43 // pred_region
          %295 = dma.done %s288, 512
        $region48: #{tpu_custom_call.1} parent=43 // pred_fallthru
          _
        %s296 = sand.u32 %s74, 1
        %s297 = scalar_lea.sflag [#allocation6], %s296
        %s298 = sand.u32 %s74, 1
        %s299 = smul.addr %s298, 8
        %s300 = scalar_lea.vmem [#allocation5], %s299
        // Predicated region
        $region49: #{tpu_custom_call.1} parent=43 // pred_check
          %p301 = pneg %p87
        $region50: #{tpu_custom_call.1} parent=43 // pred_check_branch
          %303 = sbr.rel (%p301) target = $region52
        $region51: #{tpu_custom_call.1} parent=43 // pred_region
          %304 = dma.done %s297, 128
        $region52: #{tpu_custom_call.1} parent=43 // pred_fallthru
          _
        %s305 = sand.u32 %s46, 1
        %s306 = scalar_lea.sflag [#allocation3], %s305
        %s307 = sand.u32 %s46, 1
        %s308 = smul.addr %s307, 32
        %s309 = scalar_lea.vmem [#allocation2], %s308
        %p310 = pneg %p59
        %p311 = pneg %p56
        %s312 = sand.u32 %s74, 1
        %s313 = scalar_lea.sflag [#allocation6], %s312
        %s314 = sand.u32 %s74, 1
        %s315 = smul.addr %s314, 8
        %s316 = scalar_lea.vmem [#allocation5], %s315
        %p317 = pneg %p87
        %p318 = pneg %p84
        %p319 = scmp.lt.s32.totalorder %s31, 1
        %s320 = scalar_select %p319, %s31, 1
        %s321 = smul.addr %s320, 8
        %s322 = scalar_lea.vmem %s2, %s321
        %p323 = pneg %p113
        %p324 = pneg %p110
        %p325 = pneg %p134
        %p326 = pneg %p131
        %p327 = pneg %p155
        %p328 = pneg %p152
        %p329 = pneg %p176
        %p330 = pneg %p173
        %p331 = pneg %p204
        %p332 = pneg %p201
        %s333 = sand.u32 %s191, 1
        %s334 = scalar_lea.sflag [#allocation4], %s333
        %s335 = sand.u32 %s191, 1
        %s336 = smul.addr %s335, 4
        %s337 = scalar_lea.vmem [#allocation7], %s336
        %p338 = scmp.lt.s32.totalorder %s31, 1
        %s339 = scalar_select %p338, %s31, 1
        %s340 = smul.addr %s339, 8
        %s341 = scalar_lea.vmem %s2, %s340
        %v342 = vld [vmem:[%s291] sm:$0xff]
        %v343 = vld [vmem:[%s291 + $0x8] sm:$0xff]
        %v344 = vld [vmem:[%s291 + $0x10] sm:$0xff]
        %v345 = vld [vmem:[%s291 + $0x18] sm:$0xff]
        %v346 = vld [vmem:[%s3] sm:$0xff]
        %vm347 = vcmask 64512
        %v349 = vsel %vm347, %v342, 0
        %351 = vmatprep.subr.mxu0 0.0
        %352 = vmatpush1.msra.mxu0 0.0
        %353 = vmatprep.subr.mxu0 0.0
        %354 = vmatpush1.msra.mxu0 0.0
        %355 = vmatprep.subr.mxu0 0.0
        %356 = vmatpush1.msra.mxu0 0.0
        %357 = vmatprep.subr.mxu0 0.0
        %358 = vmatpush1.msra.mxu0 0.0
        %359 = vmatprep.subr.mxu0 0.0
        %360 = vmatpush1.msra.mxu0 0.0
        %361 = vmatprep.subr.mxu0 0.0
        %362 = vmatpush1.msra.mxu0 0.0
        %363 = vmatprep.subr.mxu0 0.0
        %364 = vmatpush1.msra.mxu0 0.0
        %365 = vmatprep.subr.mxu0 0.0
        %366 = vmatpush1.msra.mxu0 0.0
        %367 = vmatprep.subr.mxu0 0.0
        %368 = vmatpush1.msra.mxu0 0.0
        %369 = vmatprep.subr.mxu0 0.0
        %370 = vmatpush1.msra.mxu0 0.0
        %371 = vmatprep.subr.mxu0 0.0
        %372 = vmatpush1.msra.mxu0 0.0
        %373 = vmatprep.subr.mxu0 0.0
        %374 = vmatpush1.msra.mxu0 0.0
        %375 = vmatprep.subr.mxu0 0.0
        %376 = vmatpush1.msra.mxu0 0.0
        %377 = vmatprep.subr.mxu0 0.0
        %378 = vmatpush1.msra.mxu0 0.0
        %379 = vmatprep.subr.mxu0 0.0
        %380 = vmatpush1.msra.mxu0 0.0
        %381 = vmatprep.subr.mxu0 0.0
        %382 = vmatpush1.msra.mxu0 %v346
        %383 = vmatprep.subr.mxu0 0.0
        %384 = vmatpush2.msra.mxu0 0.0
        %385 = vmatprep.subr.mxu0 0.0
        %386 = vmatpush2.msra.mxu0 0.0
        %387 = vmatprep.subr.mxu0 0.0
        %388 = vmatpush2.msra.mxu0 0.0
        %389 = vmatprep.subr.mxu0 0.0
        %390 = vmatpush2.msra.mxu0 0.0
        %391 = vmatprep.subr.mxu0 0.0
        %392 = vmatpush2.msra.mxu0 0.0
        %393 = vmatprep.subr.mxu0 0.0
        %394 = vmatpush2.msra.mxu0 0.0
        %395 = vmatprep.subr.mxu0 0.0
        %396 = vmatpush2.msra.mxu0 0.0
        %397 = vmatprep.subr.mxu0 0.0
        %398 = vmatpush2.msra.mxu0 0.0
        %399 = vmatprep.subr.mxu0 0.0
        %400 = vmatpush2.msra.mxu0 0.0
        %401 = vmatprep.subr.mxu0 0.0
        %402 = vmatpush2.msra.mxu0 0.0
        %403 = vmatprep.subr.mxu0 0.0
        %404 = vmatpush2.msra.mxu0 0.0
        %405 = vmatprep.subr.mxu0 0.0
        %406 = vmatpush2.msra.mxu0 0.0
        %407 = vmatprep.subr.mxu0 0.0
        %408 = vmatpush2.msra.mxu0 0.0
        %409 = vmatprep.subr.mxu0 0.0
        %410 = vmatpush2.msra.mxu0 0.0
        %411 = vmatprep.subr.mxu0 0.0
        %412 = vmatpush2.msra.mxu0 0.0
        %413 = vmatprep.subr.mxu0 0.0
        %414 = vmatpush2.msra.mxu0 0.0
        %415 = vmatprep.mubr.f32.mxu0 0.0
        %416 = vmatmul.mubr.f32.gmra.mxu0 %v349
        %v417 = vpop.f32.mrf.mxu0
        %v418 = vadd.f32 0.0, %v417
        %v419 = vpop.f32.mrf.mxu0
        %420 = vdwg.mxu0
        %v422 = vsel %vm347, %v343, 0
        %424 = vmatprep.subr.mxu0 0.0
        %425 = vmatpush1.msra.mxu0 0.0
        %426 = vmatprep.subr.mxu0 0.0
        %427 = vmatpush1.msra.mxu0 0.0
        %428 = vmatprep.subr.mxu0 0.0
        %429 = vmatpush1.msra.mxu0 0.0
        %430 = vmatprep.subr.mxu0 0.0
        %431 = vmatpush1.msra.mxu0 0.0
        %432 = vmatprep.subr.mxu0 0.0
        %433 = vmatpush1.msra.mxu0 0.0
        %434 = vmatprep.subr.mxu0 0.0
        %435 = vmatpush1.msra.mxu0 0.0
        %436 = vmatprep.subr.mxu0 0.0
        %437 = vmatpush1.msra.mxu0 0.0
        %438 = vmatprep.subr.mxu0 0.0
        %439 = vmatpush1.msra.mxu0 0.0
        %440 = vmatprep.subr.mxu0 0.0
        %441 = vmatpush1.msra.mxu0 0.0
        %442 = vmatprep.subr.mxu0 0.0
        %443 = vmatpush1.msra.mxu0 0.0
        %444 = vmatprep.subr.mxu0 0.0
        %445 = vmatpush1.msra.mxu0 0.0
        %446 = vmatprep.subr.mxu0 0.0
        %447 = vmatpush1.msra.mxu0 0.0
        %448 = vmatprep.subr.mxu0 0.0
        %449 = vmatpush1.msra.mxu0 0.0
        %450 = vmatprep.subr.mxu0 0.0
        %451 = vmatpush1.msra.mxu0 0.0
        %452 = vmatprep.subr.mxu0 0.0
        %453 = vmatpush1.msra.mxu0 0.0
        %454 = vmatprep.subr.mxu0 0.0
        %455 = vmatpush1.msra.mxu0 %v346
        %456 = vmatprep.subr.mxu0 0.0
        %457 = vmatpush2.msra.mxu0 0.0
        %458 = vmatprep.subr.mxu0 0.0
        %459 = vmatpush2.msra.mxu0 0.0
        %460 = vmatprep.subr.mxu0 0.0
        %461 = vmatpush2.msra.mxu0 0.0
        %462 = vmatprep.subr.mxu0 0.0
        %463 = vmatpush2.msra.mxu0 0.0
        %464 = vmatprep.subr.mxu0 0.0
        %465 = vmatpush2.msra.mxu0 0.0
        %466 = vmatprep.subr.mxu0 0.0
        %467 = vmatpush2.msra.mxu0 0.0
        %468 = vmatprep.subr.mxu0 0.0
        %469 = vmatpush2.msra.mxu0 0.0
        %470 = vmatprep.subr.mxu0 0.0
        %471 = vmatpush2.msra.mxu0 0.0
        %472 = vmatprep.subr.mxu0 0.0
        %473 = vmatpush2.msra.mxu0 0.0
        %474 = vmatprep.subr.mxu0 0.0
        %475 = vmatpush2.msra.mxu0 0.0
        %476 = vmatprep.subr.mxu0 0.0
        %477 = vmatpush2.msra.mxu0 0.0
        %478 = vmatprep.subr.mxu0 0.0
        %479 = vmatpush2.msra.mxu0 0.0
        %480 = vmatprep.subr.mxu0 0.0
        %481 = vmatpush2.msra.mxu0 0.0
        %482 = vmatprep.subr.mxu0 0.0
        %483 = vmatpush2.msra.mxu0 0.0
        %484 = vmatprep.subr.mxu0 0.0
        %485 = vmatpush2.msra.mxu0 0.0
        %486 = vmatprep.subr.mxu0 0.0
        %487 = vmatpush2.msra.mxu0 0.0
        %488 = vmatprep.mubr.f32.mxu0 0.0
        %489 = vmatmul.mubr.f32.gmra.mxu0 %v422
        %v490 = vpop.f32.mrf.mxu0
        %v491 = vadd.f32 0.0, %v490
        %v492 = vpop.f32.mrf.mxu0
        %493 = vdwg.mxu0
        %v495 = vsel %vm347, %v344, 0
        %497 = vmatprep.subr.mxu0 0.0
        %498 = vmatpush1.msra.mxu0 0.0
        %499 = vmatprep.subr.mxu0 0.0
        %500 = vmatpush1.msra.mxu0 0.0
        %501 = vmatprep.subr.mxu0 0.0
        %502 = vmatpush1.msra.mxu0 0.0
        %503 = vmatprep.subr.mxu0 0.0
        %504 = vmatpush1.msra.mxu0 0.0
        %505 = vmatprep.subr.mxu0 0.0
        %506 = vmatpush1.msra.mxu0 0.0
        %507 = vmatprep.subr.mxu0 0.0
        %508 = vmatpush1.msra.mxu0 0.0
        %509 = vmatprep.subr.mxu0 0.0
        %510 = vmatpush1.msra.mxu0 0.0
        %511 = vmatprep.subr.mxu0 0.0
        %512 = vmatpush1.msra.mxu0 0.0
        %513 = vmatprep.subr.mxu0 0.0
        %514 = vmatpush1.msra.mxu0 0.0
        %515 = vmatprep.subr.mxu0 0.0
        %516 = vmatpush1.msra.mxu0 0.0
        %517 = vmatprep.subr.mxu0 0.0
        %518 = vmatpush1.msra.mxu0 0.0
        %519 = vmatprep.subr.mxu0 0.0
        %520 = vmatpush1.msra.mxu0 0.0
        %521 = vmatprep.subr.mxu0 0.0
        %522 = vmatpush1.msra.mxu0 0.0
        %523 = vmatprep.subr.mxu0 0.0
        %524 = vmatpush1.msra.mxu0 0.0
        %525 = vmatprep.subr.mxu0 0.0
        %526 = vmatpush1.msra.mxu0 0.0
        %527 = vmatprep.subr.mxu0 0.0
        %528 = vmatpush1.msra.mxu0 %v346
        %529 = vmatprep.subr.mxu0 0.0
        %530 = vmatpush2.msra.mxu0 0.0
        %531 = vmatprep.subr.mxu0 0.0
        %532 = vmatpush2.msra.mxu0 0.0
        %533 = vmatprep.subr.mxu0 0.0
        %534 = vmatpush2.msra.mxu0 0.0
        %535 = vmatprep.subr.mxu0 0.0
        %536 = vmatpush2.msra.mxu0 0.0
        %537 = vmatprep.subr.mxu0 0.0
        %538 = vmatpush2.msra.mxu0 0.0
        %539 = vmatprep.subr.mxu0 0.0
        %540 = vmatpush2.msra.mxu0 0.0
        %541 = vmatprep.subr.mxu0 0.0
        %542 = vmatpush2.msra.mxu0 0.0
        %543 = vmatprep.subr.mxu0 0.0
        %544 = vmatpush2.msra.mxu0 0.0
        %545 = vmatprep.subr.mxu0 0.0
        %546 = vmatpush2.msra.mxu0 0.0
        %547 = vmatprep.subr.mxu0 0.0
        %548 = vmatpush2.msra.mxu0 0.0
        %549 = vmatprep.subr.mxu0 0.0
        %550 = vmatpush2.msra.mxu0 0.0
        %551 = vmatprep.subr.mxu0 0.0
        %552 = vmatpush2.msra.mxu0 0.0
        %553 = vmatprep.subr.mxu0 0.0
        %554 = vmatpush2.msra.mxu0 0.0
        %555 = vmatprep.subr.mxu0 0.0
        %556 = vmatpush2.msra.mxu0 0.0
        %557 = vmatprep.subr.mxu0 0.0
        %558 = vmatpush2.msra.mxu0 0.0
        %559 = vmatprep.subr.mxu0 0.0
        %560 = vmatpush2.msra.mxu0 0.0
        %561 = vmatprep.mubr.f32.mxu0 0.0
        %562 = vmatmul.mubr.f32.gmra.mxu0 %v495
        %v563 = vpop.f32.mrf.mxu0
        %v564 = vadd.f32 0.0, %v563
        %v565 = vpop.f32.mrf.mxu0
        %566 = vdwg.mxu0
        %v568 = vsel %vm347, %v345, 0
        %570 = vmatprep.subr.mxu0 0.0
        %571 = vmatpush1.msra.mxu0 0.0
        %572 = vmatprep.subr.mxu0 0.0
        %573 = vmatpush1.msra.mxu0 0.0
        %574 = vmatprep.subr.mxu0 0.0
        %575 = vmatpush1.msra.mxu0 0.0
        %576 = vmatprep.subr.mxu0 0.0
        %577 = vmatpush1.msra.mxu0 0.0
        %578 = vmatprep.subr.mxu0 0.0
        %579 = vmatpush1.msra.mxu0 0.0
        %580 = vmatprep.subr.mxu0 0.0
        %581 = vmatpush1.msra.mxu0 0.0
        %582 = vmatprep.subr.mxu0 0.0
        %583 = vmatpush1.msra.mxu0 0.0
        %584 = vmatprep.subr.mxu0 0.0
        %585 = vmatpush1.msra.mxu0 0.0
        %586 = vmatprep.subr.mxu0 0.0
        %587 = vmatpush1.msra.mxu0 0.0
        %588 = vmatprep.subr.mxu0 0.0
        %589 = vmatpush1.msra.mxu0 0.0
        %590 = vmatprep.subr.mxu0 0.0
        %591 = vmatpush1.msra.mxu0 0.0
        %592 = vmatprep.subr.mxu0 0.0
        %593 = vmatpush1.msra.mxu0 0.0
        %594 = vmatprep.subr.mxu0 0.0
        %595 = vmatpush1.msra.mxu0 0.0
        %596 = vmatprep.subr.mxu0 0.0
        %597 = vmatpush1.msra.mxu0 0.0
        %598 = vmatprep.subr.mxu0 0.0
        %599 = vmatpush1.msra.mxu0 0.0
        %600 = vmatprep.subr.mxu0 0.0
        %601 = vmatpush1.msra.mxu0 %v346
        %602 = vmatprep.subr.mxu0 0.0
        %603 = vmatpush2.msra.mxu0 0.0
        %604 = vmatprep.subr.mxu0 0.0
        %605 = vmatpush2.msra.mxu0 0.0
        %606 = vmatprep.subr.mxu0 0.0
        %607 = vmatpush2.msra.mxu0 0.0
        %608 = vmatprep.subr.mxu0 0.0
        %609 = vmatpush2.msra.mxu0 0.0
        %610 = vmatprep.subr.mxu0 0.0
        %611 = vmatpush2.msra.mxu0 0.0
        %612 = vmatprep.subr.mxu0 0.0
        %613 = vmatpush2.msra.mxu0 0.0
        %614 = vmatprep.subr.mxu0 0.0
        %615 = vmatpush2.msra.mxu0 0.0
        %616 = vmatprep.subr.mxu0 0.0
        %617 = vmatpush2.msra.mxu0 0.0
        %618 = vmatprep.subr.mxu0 0.0
        %619 = vmatpush2.msra.mxu0 0.0
        %620 = vmatprep.subr.mxu0 0.0
        %621 = vmatpush2.msra.mxu0 0.0
        %622 = vmatprep.subr.mxu0 0.0
        %623 = vmatpush2.msra.mxu0 0.0
        %624 = vmatprep.subr.mxu0 0.0
        %625 = vmatpush2.msra.mxu0 0.0
        %626 = vmatprep.subr.mxu0 0.0
        %627 = vmatpush2.msra.mxu0 0.0
        %628 = vmatprep.subr.mxu0 0.0
        %629 = vmatpush2.msra.mxu0 0.0
        %630 = vmatprep.subr.mxu0 0.0
        %631 = vmatpush2.msra.mxu0 0.0
        %632 = vmatprep.subr.mxu0 0.0
        %633 = vmatpush2.msra.mxu0 0.0
        %634 = vmatprep.mubr.f32.mxu0 0.0
        %635 = vmatmul.mubr.f32.gmra.mxu0 %v568
        %v636 = vpop.f32.mrf.mxu0
        %v637 = vadd.f32 0.0, %v636
        %v638 = vpop.f32.mrf.mxu0
        %639 = vdwg.mxu0
        %v640 = vld [vmem:[%s341] sm:$0xff]
        %v642 = vsel %vm347, %v640, 0
        %644 = vmatprep.subr.mxu0 0.0
        %645 = vmatpush1.msra.mxu0 0.0
        %646 = vmatprep.subr.mxu0 0.0
        %647 = vmatpush1.msra.mxu0 0.0
        %648 = vmatprep.subr.mxu0 0.0
        %649 = vmatpush1.msra.mxu0 0.0
        %650 = vmatprep.subr.mxu0 0.0
        %651 = vmatpush1.msra.mxu0 0.0
        %652 = vmatprep.subr.mxu0 0.0
        %653 = vmatpush1.msra.mxu0 0.0
        %654 = vmatprep.subr.mxu0 0.0
        %655 = vmatpush1.msra.mxu0 0.0
        %656 = vmatprep.subr.mxu0 0.0
        %657 = vmatpush1.msra.mxu0 0.0
        %658 = vmatprep.subr.mxu0 0.0
        %659 = vmatpush1.msra.mxu0 0.0
        %660 = vmatprep.subr.mxu0 0.0
        %661 = vmatpush1.msra.mxu0 0.0
        %662 = vmatprep.subr.mxu0 0.0
        %663 = vmatpush1.msra.mxu0 0.0
        %664 = vmatprep.subr.mxu0 0.0
        %665 = vmatpush1.msra.mxu0 0.0
        %666 = vmatprep.subr.mxu0 0.0
        %667 = vmatpush1.msra.mxu0 0.0
        %668 = vmatprep.subr.mxu0 0.0
        %669 = vmatpush1.msra.mxu0 0.0
        %670 = vmatprep.subr.mxu0 0.0
        %671 = vmatpush1.msra.mxu0 0.0
        %672 = vmatprep.subr.mxu0 0.0
        %673 = vmatpush1.msra.mxu0 0.0
        %674 = vmatprep.subr.mxu0 0.0
        %675 = vmatpush1.msra.mxu0 %v418
        %676 = vmatprep.subr.mxu0 0.0
        %677 = vmatpush2.msra.mxu0 0.0
        %678 = vmatprep.subr.mxu0 0.0
        %679 = vmatpush2.msra.mxu0 0.0
        %680 = vmatprep.subr.mxu0 0.0
        %681 = vmatpush2.msra.mxu0 0.0
        %682 = vmatprep.subr.mxu0 0.0
        %683 = vmatpush2.msra.mxu0 0.0
        %684 = vmatprep.subr.mxu0 0.0
        %685 = vmatpush2.msra.mxu0 0.0
        %686 = vmatprep.subr.mxu0 0.0
        %687 = vmatpush2.msra.mxu0 0.0
        %688 = vmatprep.subr.mxu0 0.0
        %689 = vmatpush2.msra.mxu0 0.0
        %690 = vmatprep.subr.mxu0 0.0
        %691 = vmatpush2.msra.mxu0 0.0
        %692 = vmatprep.subr.mxu0 0.0
        %693 = vmatpush2.msra.mxu0 0.0
        %694 = vmatprep.subr.mxu0 0.0
        %695 = vmatpush2.msra.mxu0 0.0
        %696 = vmatprep.subr.mxu0 0.0
        %697 = vmatpush2.msra.mxu0 0.0
        %698 = vmatprep.subr.mxu0 0.0
        %699 = vmatpush2.msra.mxu0 0.0
        %700 = vmatprep.subr.mxu0 0.0
        %701 = vmatpush2.msra.mxu0 0.0
        %702 = vmatprep.subr.mxu0 0.0
        %703 = vmatpush2.msra.mxu0 0.0
        %704 = vmatprep.subr.mxu0 0.0
        %705 = vmatpush2.msra.mxu0 0.0
        %706 = vmatprep.subr.mxu0 0.0
        %707 = vmatpush2.msra.mxu0 0.0
        %708 = vmatprep.mubr.f32.mxu0 0.0
        %709 = vmatmul.mubr.f32.gmra.mxu0 %v642
        %v710 = vpop.f32.mrf.mxu0
        %v711 = vadd.f32 0.0, %v710
        %v712 = vpop.f32.mrf.mxu0
        %713 = vdwg.mxu0
        %714 = vmatprep.subr.mxu0 0.0
        %715 = vmatpush1.msra.mxu0 0.0
        %716 = vmatprep.subr.mxu0 0.0
        %717 = vmatpush1.msra.mxu0 0.0
        %718 = vmatprep.subr.mxu0 0.0
        %719 = vmatpush1.msra.mxu0 0.0
        %720 = vmatprep.subr.mxu0 0.0
        %721 = vmatpush1.msra.mxu0 0.0
        %722 = vmatprep.subr.mxu0 0.0
        %723 = vmatpush1.msra.mxu0 0.0
        %724 = vmatprep.subr.mxu0 0.0
        %725 = vmatpush1.msra.mxu0 0.0
        %726 = vmatprep.subr.mxu0 0.0
        %727 = vmatpush1.msra.mxu0 0.0
        %728 = vmatprep.subr.mxu0 0.0
        %729 = vmatpush1.msra.mxu0 0.0
        %730 = vmatprep.subr.mxu0 0.0
        %731 = vmatpush1.msra.mxu0 0.0
        %732 = vmatprep.subr.mxu0 0.0
        %733 = vmatpush1.msra.mxu0 0.0
        %734 = vmatprep.subr.mxu0 0.0
        %735 = vmatpush1.msra.mxu0 0.0
        %736 = vmatprep.subr.mxu0 0.0
        %737 = vmatpush1.msra.mxu0 0.0
        %738 = vmatprep.subr.mxu0 0.0
        %739 = vmatpush1.msra.mxu0 0.0
        %740 = vmatprep.subr.mxu0 0.0
        %741 = vmatpush1.msra.mxu0 0.0
        %742 = vmatprep.subr.mxu0 0.0
        %743 = vmatpush1.msra.mxu0 0.0
        %744 = vmatprep.subr.mxu0 0.0
        %745 = vmatpush1.msra.mxu0 %v491
        %746 = vmatprep.subr.mxu0 0.0
        %747 = vmatpush2.msra.mxu0 0.0
        %748 = vmatprep.subr.mxu0 0.0
        %749 = vmatpush2.msra.mxu0 0.0
        %750 = vmatprep.subr.mxu0 0.0
        %751 = vmatpush2.msra.mxu0 0.0
        %752 = vmatprep.subr.mxu0 0.0
        %753 = vmatpush2.msra.mxu0 0.0
        %754 = vmatprep.subr.mxu0 0.0
        %755 = vmatpush2.msra.mxu0 0.0
        %756 = vmatprep.subr.mxu0 0.0
        %757 = vmatpush2.msra.mxu0 0.0
        %758 = vmatprep.subr.mxu0 0.0
        %759 = vmatpush2.msra.mxu0 0.0
        %760 = vmatprep.subr.mxu0 0.0
        %761 = vmatpush2.msra.mxu0 0.0
        %762 = vmatprep.subr.mxu0 0.0
        %763 = vmatpush2.msra.mxu0 0.0
        %764 = vmatprep.subr.mxu0 0.0
        %765 = vmatpush2.msra.mxu0 0.0
        %766 = vmatprep.subr.mxu0 0.0
        %767 = vmatpush2.msra.mxu0 0.0
        %768 = vmatprep.subr.mxu0 0.0
        %769 = vmatpush2.msra.mxu0 0.0
        %770 = vmatprep.subr.mxu0 0.0
        %771 = vmatpush2.msra.mxu0 0.0
        %772 = vmatprep.subr.mxu0 0.0
        %773 = vmatpush2.msra.mxu0 0.0
        %774 = vmatprep.subr.mxu0 0.0
        %775 = vmatpush2.msra.mxu0 0.0
        %776 = vmatprep.subr.mxu0 0.0
        %777 = vmatpush2.msra.mxu0 0.0
        %778 = vmatprep.mubr.f32.mxu0 0.0
        %779 = vmatmul.mubr.f32.gmra.mxu0 %v642
        %v780 = vpop.f32.mrf.mxu0
        %v781 = vadd.f32 0.0, %v780
        %v782 = vpop.f32.mrf.mxu0
        %783 = vdwg.mxu0
        %784 = vmatprep.subr.mxu0 0.0
        %785 = vmatpush1.msra.mxu0 0.0
        %786 = vmatprep.subr.mxu0 0.0
        %787 = vmatpush1.msra.mxu0 0.0
        %788 = vmatprep.subr.mxu0 0.0
        %789 = vmatpush1.msra.mxu0 0.0
        %790 = vmatprep.subr.mxu0 0.0
        %791 = vmatpush1.msra.mxu0 0.0
        %792 = vmatprep.subr.mxu0 0.0
        %793 = vmatpush1.msra.mxu0 0.0
        %794 = vmatprep.subr.mxu0 0.0
        %795 = vmatpush1.msra.mxu0 0.0
        %796 = vmatprep.subr.mxu0 0.0
        %797 = vmatpush1.msra.mxu0 0.0
        %798 = vmatprep.subr.mxu0 0.0
        %799 = vmatpush1.msra.mxu0 0.0
        %800 = vmatprep.subr.mxu0 0.0
        %801 = vmatpush1.msra.mxu0 0.0
        %802 = vmatprep.subr.mxu0 0.0
        %803 = vmatpush1.msra.mxu0 0.0
        %804 = vmatprep.subr.mxu0 0.0
        %805 = vmatpush1.msra.mxu0 0.0
        %806 = vmatprep.subr.mxu0 0.0
        %807 = vmatpush1.msra.mxu0 0.0
        %808 = vmatprep.subr.mxu0 0.0
        %809 = vmatpush1.msra.mxu0 0.0
        %810 = vmatprep.subr.mxu0 0.0
        %811 = vmatpush1.msra.mxu0 0.0
        %812 = vmatprep.subr.mxu0 0.0
        %813 = vmatpush1.msra.mxu0 0.0
        %814 = vmatprep.subr.mxu0 0.0
        %815 = vmatpush1.msra.mxu0 %v564
        %816 = vmatprep.subr.mxu0 0.0
        %817 = vmatpush2.msra.mxu0 0.0
        %818 = vmatprep.subr.mxu0 0.0
        %819 = vmatpush2.msra.mxu0 0.0
        %820 = vmatprep.subr.mxu0 0.0
        %821 = vmatpush2.msra.mxu0 0.0
        %822 = vmatprep.subr.mxu0 0.0
        %823 = vmatpush2.msra.mxu0 0.0
        %824 = vmatprep.subr.mxu0 0.0
        %825 = vmatpush2.msra.mxu0 0.0
        %826 = vmatprep.subr.mxu0 0.0
        %827 = vmatpush2.msra.mxu0 0.0
        %828 = vmatprep.subr.mxu0 0.0
        %829 = vmatpush2.msra.mxu0 0.0
        %830 = vmatprep.subr.mxu0 0.0
        %831 = vmatpush2.msra.mxu0 0.0
        %832 = vmatprep.subr.mxu0 0.0
        %833 = vmatpush2.msra.mxu0 0.0
        %834 = vmatprep.subr.mxu0 0.0
        %835 = vmatpush2.msra.mxu0 0.0
        %836 = vmatprep.subr.mxu0 0.0
        %837 = vmatpush2.msra.mxu0 0.0
        %838 = vmatprep.subr.mxu0 0.0
        %839 = vmatpush2.msra.mxu0 0.0
        %840 = vmatprep.subr.mxu0 0.0
        %841 = vmatpush2.msra.mxu0 0.0
        %842 = vmatprep.subr.mxu0 0.0
        %843 = vmatpush2.msra.mxu0 0.0
        %844 = vmatprep.subr.mxu0 0.0
        %845 = vmatpush2.msra.mxu0 0.0
        %846 = vmatprep.subr.mxu0 0.0
        %847 = vmatpush2.msra.mxu0 0.0
        %848 = vmatprep.mubr.f32.mxu0 0.0
        %849 = vmatmul.mubr.f32.gmra.mxu0 %v642
        %v850 = vpop.f32.mrf.mxu0
        %v851 = vadd.f32 0.0, %v850
        %v852 = vpop.f32.mrf.mxu0
        %853 = vdwg.mxu0
        %854 = vmatprep.subr.mxu0 0.0
        %855 = vmatpush1.msra.mxu0 0.0
        %856 = vmatprep.subr.mxu0 0.0
        %857 = vmatpush1.msra.mxu0 0.0
        %858 = vmatprep.subr.mxu0 0.0
        %859 = vmatpush1.msra.mxu0 0.0
        %860 = vmatprep.subr.mxu0 0.0
        %861 = vmatpush1.msra.mxu0 0.0
        %862 = vmatprep.subr.mxu0 0.0
        %863 = vmatpush1.msra.mxu0 0.0
        %864 = vmatprep.subr.mxu0 0.0
        %865 = vmatpush1.msra.mxu0 0.0
        %866 = vmatprep.subr.mxu0 0.0
        %867 = vmatpush1.msra.mxu0 0.0
        %868 = vmatprep.subr.mxu0 0.0
        %869 = vmatpush1.msra.mxu0 0.0
        %870 = vmatprep.subr.mxu0 0.0
        %871 = vmatpush1.msra.mxu0 0.0
        %872 = vmatprep.subr.mxu0 0.0
        %873 = vmatpush1.msra.mxu0 0.0
        %874 = vmatprep.subr.mxu0 0.0
        %875 = vmatpush1.msra.mxu0 0.0
        %876 = vmatprep.subr.mxu0 0.0
        %877 = vmatpush1.msra.mxu0 0.0
        %878 = vmatprep.subr.mxu0 0.0
        %879 = vmatpush1.msra.mxu0 0.0
        %880 = vmatprep.subr.mxu0 0.0
        %881 = vmatpush1.msra.mxu0 0.0
        %882 = vmatprep.subr.mxu0 0.0
        %883 = vmatpush1.msra.mxu0 0.0
        %884 = vmatprep.subr.mxu0 0.0
        %885 = vmatpush1.msra.mxu0 %v637
        %886 = vmatprep.subr.mxu0 0.0
        %887 = vmatpush2.msra.mxu0 0.0
        %888 = vmatprep.subr.mxu0 0.0
        %889 = vmatpush2.msra.mxu0 0.0
        %890 = vmatprep.subr.mxu0 0.0
        %891 = vmatpush2.msra.mxu0 0.0
        %892 = vmatprep.subr.mxu0 0.0
        %893 = vmatpush2.msra.mxu0 0.0
        %894 = vmatprep.subr.mxu0 0.0
        %895 = vmatpush2.msra.mxu0 0.0
        %896 = vmatprep.subr.mxu0 0.0
        %897 = vmatpush2.msra.mxu0 0.0
        %898 = vmatprep.subr.mxu0 0.0
        %899 = vmatpush2.msra.mxu0 0.0
        %900 = vmatprep.subr.mxu0 0.0
        %901 = vmatpush2.msra.mxu0 0.0
        %902 = vmatprep.subr.mxu0 0.0
        %903 = vmatpush2.msra.mxu0 0.0
        %904 = vmatprep.subr.mxu0 0.0
        %905 = vmatpush2.msra.mxu0 0.0
        %906 = vmatprep.subr.mxu0 0.0
        %907 = vmatpush2.msra.mxu0 0.0
        %908 = vmatprep.subr.mxu0 0.0
        %909 = vmatpush2.msra.mxu0 0.0
        %910 = vmatprep.subr.mxu0 0.0
        %911 = vmatpush2.msra.mxu0 0.0
        %912 = vmatprep.subr.mxu0 0.0
        %913 = vmatpush2.msra.mxu0 0.0
        %914 = vmatprep.subr.mxu0 0.0
        %915 = vmatpush2.msra.mxu0 0.0
        %916 = vmatprep.subr.mxu0 0.0
        %917 = vmatpush2.msra.mxu0 0.0
        %918 = vmatprep.mubr.f32.mxu0 0.0
        %919 = vmatmul.mubr.f32.gmra.mxu0 %v642
        %v920 = vpop.f32.mrf.mxu0
        %v921 = vadd.f32 0.0, %v920
        %v922 = vpop.f32.mrf.mxu0
        %923 = vdwg.mxu0
        %v924 = vld [vmem:[%s4] sm:$0xf]
        %v925 = vld [vmem:[%s5] sm:$0xf]
        %v926 = vld [vmem:[%s300] sm:$0xff]
        %v928 = vsel %vm347, %v924, 0
        %930 = vmatprep.subr.mxu0 0.0
        %931 = vmatpush1.msra.mxu0 0.0
        %932 = vmatprep.subr.mxu0 0.0
        %933 = vmatpush1.msra.mxu0 0.0
        %934 = vmatprep.subr.mxu0 0.0
        %935 = vmatpush1.msra.mxu0 0.0
        %936 = vmatprep.subr.mxu0 0.0
        %937 = vmatpush1.msra.mxu0 0.0
        %938 = vmatprep.subr.mxu0 0.0
        %939 = vmatpush1.msra.mxu0 0.0
        %940 = vmatprep.subr.mxu0 0.0
        %941 = vmatpush1.msra.mxu0 0.0
        %942 = vmatprep.subr.mxu0 0.0
        %943 = vmatpush1.msra.mxu0 0.0
        %944 = vmatprep.subr.mxu0 0.0
        %945 = vmatpush1.msra.mxu0 0.0
        %946 = vmatprep.subr.mxu0 0.0
        %947 = vmatpush1.msra.mxu0 0.0
        %948 = vmatprep.subr.mxu0 0.0
        %949 = vmatpush1.msra.mxu0 0.0
        %950 = vmatprep.subr.mxu0 0.0
        %951 = vmatpush1.msra.mxu0 0.0
        %952 = vmatprep.subr.mxu0 0.0
        %953 = vmatpush1.msra.mxu0 0.0
        %954 = vmatprep.subr.mxu0 0.0
        %955 = vmatpush1.msra.mxu0 0.0
        %956 = vmatprep.subr.mxu0 0.0
        %957 = vmatpush1.msra.mxu0 0.0
        %958 = vmatprep.subr.mxu0 0.0
        %959 = vmatpush1.msra.mxu0 0.0
        %960 = vmatprep.subr.mxu0 0.0
        %961 = vmatpush1.msra.mxu0 %v926
        %962 = vmatprep.subr.mxu0 0.0
        %963 = vmatpush2.msra.mxu0 0.0
        %964 = vmatprep.subr.mxu0 0.0
        %965 = vmatpush2.msra.mxu0 0.0
        %966 = vmatprep.subr.mxu0 0.0
        %967 = vmatpush2.msra.mxu0 0.0
        %968 = vmatprep.subr.mxu0 0.0
        %969 = vmatpush2.msra.mxu0 0.0
        %970 = vmatprep.subr.mxu0 0.0
        %971 = vmatpush2.msra.mxu0 0.0
        %972 = vmatprep.subr.mxu0 0.0
        %973 = vmatpush2.msra.mxu0 0.0
        %974 = vmatprep.subr.mxu0 0.0
        %975 = vmatpush2.msra.mxu0 0.0
        %976 = vmatprep.subr.mxu0 0.0
        %977 = vmatpush2.msra.mxu0 0.0
        %978 = vmatprep.subr.mxu0 0.0
        %979 = vmatpush2.msra.mxu0 0.0
        %980 = vmatprep.subr.mxu0 0.0
        %981 = vmatpush2.msra.mxu0 0.0
        %982 = vmatprep.subr.mxu0 0.0
        %983 = vmatpush2.msra.mxu0 0.0
        %984 = vmatprep.subr.mxu0 0.0
        %985 = vmatpush2.msra.mxu0 0.0
        %986 = vmatprep.subr.mxu0 0.0
        %987 = vmatpush2.msra.mxu0 0.0
        %988 = vmatprep.subr.mxu0 0.0
        %989 = vmatpush2.msra.mxu0 0.0
        %990 = vmatprep.subr.mxu0 0.0
        %991 = vmatpush2.msra.mxu0 0.0
        %992 = vmatprep.subr.mxu0 0.0
        %993 = vmatpush2.msra.mxu0 0.0
        %994 = vmatprep.mubr.f32.mxu0 0.0
        %995 = vmatmul.mubr.f32.gmra.mxu0 %v928
        %v996 = vpop.f32.mrf.mxu0
        %v997 = vadd.f32 0.0, %v996
        %v998 = vpop.f32.mrf.mxu0
        %999 = vdwg.mxu0
        %v1000 = vcombine.low %v711, %v851
        %v1001 = vcombine.high %v711, %v851
        %v1003 = vunpack.c.l.s4 1983009808
        %v1004 = vunpack.c.0.s8 %v1003
        %v1005 = vlaneseq
        %v1006 = vshrl.u32 %v1005, 7
        %v1007 = vsub.s32 %v1004, %v1006
        %v1008 = vrot.slane %v1000, %v1007
        %v1010 = vunpack.c.l.s4 1983009808
        %v1011 = vunpack.c.0.s8 %v1010
        %v1012 = vlaneseq
        %v1013 = vshrl.u32 %v1012, 7
        %v1014 = vsub.s32 %v1011, %v1013
        %v1015 = vrot.slane %v1001, %v1014
        %v1016 = vcombine.low %v781, %v921
        %v1017 = vcombine.high %v781, %v921
        %v1019 = vunpack.c.l.s4 1983009808
        %v1020 = vunpack.c.0.s8 %v1019
        %v1021 = vlaneseq
        %v1022 = vshrl.u32 %v1021, 7
        %v1023 = vsub.s32 %v1020, %v1022
        %v1024 = vrot.slane %v1016, %v1023
        %v1026 = vunpack.c.l.s4 1983009808
        %v1027 = vunpack.c.0.s8 %v1026
        %v1028 = vlaneseq
        %v1029 = vshrl.u32 %v1028, 7
        %v1030 = vsub.s32 %v1027, %v1029
        %v1031 = vrot.slane %v1017, %v1030
        %v1032 = vcombine.low %v1008, %v1024
        %v1033 = vcombine.high %v1008, %v1024
        %v1035 = vunpack.c.l.s4 1934713408
        %v1036 = vunpack.c.0.s8 %v1035
        %v1037 = vlaneseq
        %v1038 = vshrl.u32 %v1037, 7
        %v1039 = vsub.s32 %v1036, %v1038
        %v1040 = vrot.slane %v1032, %v1039
        %v1042 = vunpack.c.l.s4 1934713408
        %v1043 = vunpack.c.0.s8 %v1042
        %v1044 = vlaneseq
        %v1045 = vshrl.u32 %v1044, 7
        %v1046 = vsub.s32 %v1043, %v1045
        %v1047 = vrot.slane %v1033, %v1046
        %v1048 = vcombine.low %v1015, %v1031
        %v1049 = vcombine.high %v1015, %v1031
        %v1051 = vunpack.c.l.s4 1934713408
        %v1052 = vunpack.c.0.s8 %v1051
        %v1053 = vlaneseq
        %v1054 = vshrl.u32 %v1053, 7
        %v1055 = vsub.s32 %v1052, %v1054
        %v1056 = vrot.slane %v1048, %v1055
        %v1058 = vunpack.c.l.s4 1934713408
        %v1059 = vunpack.c.0.s8 %v1058
        %v1060 = vlaneseq
        %v1061 = vshrl.u32 %v1060, 7
        %v1062 = vsub.s32 %v1059, %v1061
        %v1063 = vrot.slane %v1049, %v1062
        %v1064 = vcombine.high %v1040, 0.0
        %v1065 = vcombine.high %v1047, 0.0
        %v1066 = vcombine.high %v1056, 0.0
        %v1067 = vcombine.high %v1063, 0.0
        %1069 = vrot.lane.b32.xlu0 %v1064, 16
        %v1070 = vpop.permute.xlu0 %1069
        %1073 = vrot.lane.b32.xlu0 %v1047, 32
        %v1074 = vpop.permute.xlu0 %1073
        %1077 = vrot.lane.b32.xlu0 %v1065, 48
        %v1078 = vpop.permute.xlu0 %1077
        %1081 = vrot.lane.b32.xlu0 %v1056, 64
        %v1082 = vpop.permute.xlu0 %1081
        %1085 = vrot.lane.b32.xlu0 %v1066, 80
        %v1086 = vpop.permute.xlu0 %1085
        %1089 = vrot.lane.b32.xlu0 %v1063, 96
        %v1090 = vpop.permute.xlu0 %1089
        %1093 = vrot.lane.b32.xlu0 %v1067, 112
        %v1094 = vpop.permute.xlu0 %1093
        %vm1096 = vcmask 130048
        %v1097 = vsel %vm1096, %v1040, %v1070
        %vm1098 = vcmask 261120
        %v1099 = vsel %vm1098, %v1097, %v1074
        %vm1100 = vcmask 392192
        %v1101 = vsel %vm1100, %v1099, %v1078
        %vm1102 = vcmask 523264
        %v1103 = vsel %vm1102, %v1101, %v1082
        %vm1104 = vcmask 654336
        %v1105 = vsel %vm1104, %v1103, %v1086
        %vm1106 = vcmask 785408
        %v1107 = vsel %vm1106, %v1105, %v1090
        %vm1108 = vcmask 916480
        %v1109 = vsel %vm1108, %v1107, %v1094
        %v1110 = vadd.f32 %v1109, %v997
        %1112 = vset.pattern.permute.xlu0 0
        %1113 = vperm.xlu0 %1112, %v925
        %v1114 = vpop.permute.xlu0 %1113
        %v1116 = vadd.f32 %v1110, %v1114
        %1117 = vst [vmem:[%s337] sm:$0xf] %v1116
        %s1118 = sand.u32 %s191, 1
        %s1119 = scalar_lea.sflag [#allocation4], %s1118
        %s1120 = sand.u32 %s191, 1
        %s1121 = smul.addr %s1120, 4
        %s1122 = scalar_lea.vmem [#allocation7], %s1121
        // Predicated region
        $region53: #{tpu_custom_call.1} parent=43 // pred_check
          %p1123 = pneg %p201
        $region54: #{tpu_custom_call.1} parent=43 // pred_check_branch
          %1125 = sbr.rel (%p1123) target = $region56
        $region55: #{tpu_custom_call.1} parent=43 // pred_region
          %s1127 = ssub.s32 64, 64
          %1128 = vsyncadd %s1119, %s1127
          %s1129 = smul.addr %s30, 2
          %s1130 = sadd.s32 %s31, %s1129
          %s1131 = smul.addr %s1130, 64
          %s1132 = scalar_lea.hbm %s6, %s1131
          %s1134 = sshll.u32 %s1122, 4
          %s1135 = int_to_ptr.vmem [resolvable:$true] %s1134
          %1137 = dma.vmem_to_hbm [thread:$0]  %s1135, 64, %s1132, %s1119
        $region56: #{tpu_custom_call.1} parent=43 // pred_fallthru
          _
      $region44: #{tpu_custom_call.1} parent=5 // pred_fallthru
        _
      %p1138 = scmp.le.s32.totalorder 2, %s21
      // Predicated region
      $region57: #{tpu_custom_call.1} parent=5 // pred_check
        %p1139 = pneg %p1138
      $region58: #{tpu_custom_call.1} parent=5 // pred_check_branch
        %1141 = sbr.rel (%p1139) target = $region60
      $region59: #{tpu_custom_call.1} parent=5 // pred_region
        %s1142 = ssub.s32 %s21, 2
        // Predicated region
        $region61: #{tpu_custom_call.1} parent=59 // pred_check
          %p1143 = pneg %p207
        $region62: #{tpu_custom_call.1} parent=59 // pred_check_branch
          %1145 = sbr.rel (%p1143) target = $region64
        $region63: #{tpu_custom_call.1} parent=59 // pred_region
          %s1146 = sand.u32 %s192, 1
          %s1147 = scalar_lea.sflag [#allocation4], %s1146
          %s1148 = sand.u32 %s192, 1
          %s1149 = smul.addr %s1148, 4
          %s1150 = scalar_lea.vmem [#allocation7], %s1149
          %1151 = dma.done %s1147, 64
        $region64: #{tpu_custom_call.1} parent=59 // pred_fallthru
          _
      $region60: #{tpu_custom_call.1} parent=5 // pred_fallthru
        _
    $region6: #{tpu_custom_call.1} parent=1 // loop_footer
      %s25 = sadd.s32 1, %s21
    $region7: #{tpu_custom_call.1} parent=1 // loop_footer_branch
      %20 = sbr.rel target = $region3
    $region8: #{tpu_custom_call.1} parent=1 // loop_exit
      _
    %1152 = vsyncpa [#allocation3], 1
    %s1153 = scalar_lea.sflag [#allocation3], 1
    %1154 = vsyncpa %s1153, 1
    %1155 = vsyncpa [#allocation6], 1
    %s1156 = scalar_lea.sflag [#allocation6], 1
    %1157 = vsyncpa %s1156, 1
    %1158 = vsyncpa [#allocation4], 1
    %s1159 = scalar_lea.sflag [#allocation4], 1
    %1160 = vsyncpa %s1159, 1

</llo_original>
